<compile_context>
chip_gen: v7x
topology: tpu7x:2x2x1
jax: 0.10.0
libtpu: 0.0.40
codegen_flags: <defaults>
</compile_context>

<pallas_src>
import functools

import numpy as np
import jax
import jax.numpy as jnp
from jax import lax
from jax.experimental import pallas as pl
from jax.experimental.pallas import tpu as pltpu


def _round_up(x: int, m: int) -> int:
    return (x + m - 1) // m * m


def _pick_tile(size: int, candidates) -> int:
    for c in candidates:
        if size % c == 0:
            return c
    return size


def _vmem_limit(needed_bytes: int) -> int:
    # Actual need + small headroom, capped comfortably below v7x's 64 MiB VMEM.
    return int(min(needed_bytes + 4 * 2**20, 48 * 2**20))


# --------------------------------------------------------------------------
# Kernel 1: fused linear encode + row-wise L2 normalize for BOTH views.
#   grid = (M tiles, K tiles). The f32 output block is the K-reduction
#   accumulator (constant block index along k); W is VMEM-resident.
# --------------------------------------------------------------------------
def _encode_normalize_kernel(x_ref, w_ref, b_ref, out_ref, *, tk, w_resident):
    k = pl.program_id(1)

    @pl.when(k == 0)
    def _():
        out_ref[...] = jnp.zeros_like(out_ref)

    if w_resident:
        # Full W lives in VMEM; slice the current K chunk in-kernel.
        koff = pl.multiple_of(k * tk, tk)
        w_tile = w_ref[pl.ds(koff, tk), :]
    else:
        w_tile = w_ref[...]

    # bf16 operands, f32 accumulation -> native MXU path on v5e/v6e/v7x.
    out_ref[...] += jnp.dot(x_ref[...], w_tile,
                            preferred_element_type=jnp.float32)

    @pl.when(k == pl.num_programs(1) - 1)
    def _():
        emb = out_ref[...] + b_ref[...]                      # (tm, Dp) f32
        ss = jnp.sum(emb * emb, axis=1, keepdims=True)
        # F.normalize(p=2, dim=1, eps=1e-12) == emb * rsqrt(max(ss, eps^2));
        # rsqrt runs on the otherwise-idle EUP slot.
        out_ref[...] = emb * lax.rsqrt(jnp.maximum(ss, 1e-24))


def encode_normalize(xp, wp, bp):
    """xp:(Mp,Kp) bf16 zero-padded, wp:(Kp,Dp) bf16, bp:(1,Dp) f32 ->
    (Mp, Dp) f32 row-normalized embeddings. Padded columns are exactly zero."""
    Mp, Kp = xp.shape
    Dp = wp.shape[1]

    tm = _pick_tile(Mp, (512, 256, 128, 64, 32, 16, 8))
    tk = _pick_tile(Kp, (512, 256, 128))
    # TODO(synk): pad Dout/K to multiples of 256 on v6e/v7x for very wide
    # encoders; 128 alignment is fine at sentence-embedding widths.

    w_bytes = Kp * Dp * 2
    w_resident = w_bytes <= 8 * 2**20          # keep full W in VMEM when it fits
    if w_resident:
        w_spec = pl.BlockSpec((Kp, Dp), lambda m, k: (0, 0))   # loaded once
        w_vmem = 2 * w_bytes
    else:
        w_spec = pl.BlockSpec((tk, Dp), lambda m, k: (k, 0))   # streamed
        w_vmem = 2 * tk * Dp * 2

    vmem_needed = (2 * tm * tk * 2      # x tiles (double-buffered, bf16)
                   + w_vmem             # weights
                   + 2 * Dp * 4         # bias
                   + 2 * tm * Dp * 4)   # resident f32 output/accumulator block
    cost = pl.CostEstimate(
        flops=2 * Mp * Kp * Dp + 4 * Mp * Dp,
        transcendentals=Mp,
        bytes_accessed=Mp * Kp * 2 + Kp * Dp * 2 + Dp * 4 + Mp * Dp * 4,
    )

    kernel = functools.partial(_encode_normalize_kernel, tk=tk,
                               w_resident=w_resident)

    return pl.pallas_call(
        kernel,
        out_shape=jax.ShapeDtypeStruct((Mp, Dp), jnp.float32),
        grid_spec=pltpu.PrefetchScalarGridSpec(
            num_scalar_prefetch=0,
            grid=(Mp // tm, Kp // tk),
            in_specs=[
                pl.BlockSpec((tm, tk), lambda m, k: (m, k)),
                w_spec,
                pl.BlockSpec((1, Dp), lambda m, k: (0, 0)),
            ],
            out_specs=pl.BlockSpec((tm, Dp), lambda m, k: (m, 0)),
        ),
        compiler_params=pltpu.CompilerParams(
            dimension_semantics=("parallel", "arbitrary"),
            vmem_limit_bytes=_vmem_limit(vmem_needed),
        ),
        cost_estimate=cost,
    )(xp, wp, bp)


# --------------------------------------------------------------------------
# Kernel 2: batched triplet margin loss.
#   PyTorch defaults: p=2, eps=1e-6, swap=False, reduction='mean';
#   d(x, y) = ||x - y + eps||_2 (eps applied only to the real columns).
#   T triplets per grid step; padded rows zeroed by the validity mask.
# --------------------------------------------------------------------------
def _triplet_loss_kernel(a_ref, p_ref, n_ref, eps_ref, mask_ref,
                         out_ref, acc_ref, *, margin, inv_n):
    i = pl.program_id(0)

    @pl.when(i == 0)
    def _():
        acc_ref[...] = jnp.zeros_like(acc_ref)

    eps_row = eps_ref[...]                      # (1, Dp), DMA'd once (const index)
    a = a_ref[...]
    dp = a - p_ref[...] + eps_row
    dn = a - n_ref[...] + eps_row
    d_pos = jnp.sqrt(jnp.sum(dp * dp, axis=1, keepdims=True))   # (T, 1)
    d_neg = jnp.sqrt(jnp.sum(dn * dn, axis=1, keepdims=True))
    hinge = jnp.maximum(d_pos - d_neg + margin, 0.0) * mask_ref[...]
    acc_ref[...] += jnp.sum(hinge, axis=0, keepdims=True)        # (1, 1)

    @pl.when(i == pl.num_programs(0) - 1)
    def _():
        out_ref[0, 0] = jnp.sum(acc_ref[...]) * inv_n


def triplet_margin_loss_batched(anchors, positives, negatives, valid_mask,
                                eps_row, n_valid, margin):
    Tp, Dp = anchors.shape
    T = Tp if Tp <= 256 else 256          # wrapper guarantees Tp % T == 0
    assert Tp % T == 0

    kernel = functools.partial(_triplet_loss_kernel,
                               margin=float(margin), inv_n=1.0 / float(n_valid))

    vmem_needed = 2 * (3 * T * Dp * 4 + Dp * 4 + T * 4) + 1024
    cost = pl.CostEstimate(
        flops=10 * Tp * Dp,
        transcendentals=2 * Tp,
        bytes_accessed=3 * Tp * Dp * 4 + Tp * 4 + Dp * 4 + 4,
    )

    out = pl.pallas_call(
        kernel,
        out_shape=jax.ShapeDtypeStruct((1, 1), jnp.float32),
        grid_spec=pltpu.PrefetchScalarGridSpec(
            num_scalar_prefetch=0,
            grid=(Tp // T,),
            in_specs=[
                pl.BlockSpec((T, Dp), lambda i: (i, 0)),
                pl.BlockSpec((T, Dp), lambda i: (i, 0)),
                pl.BlockSpec((T, Dp), lambda i: (i, 0)),
                pl.BlockSpec((1, Dp), lambda i: (0, 0)),   # eps row, loaded once
                pl.BlockSpec((T, 1), lambda i: (i, 0)),    # validity mask
            ],
            out_specs=pl.BlockSpec(memory_space=pltpu.MemorySpace.SMEM),
            scratch_shapes=[pltpu.VMEM((1, 1), jnp.float32)],
        ),
        compiler_params=pltpu.CompilerParams(
            # TODO(synk): on v7x a leading size-2 "parallel" axis with per-core
            # partial sums would use both TensorCores; negligible after batching.
            dimension_semantics=("arbitrary",),
            vmem_limit_bytes=_vmem_limit(vmem_needed),
        ),
        cost_estimate=cost,
    )(anchors, positives, negatives, eps_row, valid_mask)
    return out[0, 0]


# --------------------------------------------------------------------------
# Jitted device-side pipeline: concat+cast+pad X (fused), encode, gather,
# batched loss. Everything shape-static under the trace.
# --------------------------------------------------------------------------
@functools.partial(jax.jit, static_argnames=("dout", "n_valid", "margin", "eps"))
def _loss_impl(feat_a, feat_b, wp, bp, a_idx, p_idx, n_idx, *,
               dout, n_valid, margin, eps):
    B, Din = feat_a.shape
    Kp, Dp = wp.shape
    M = 2 * B
    Mp = _round_up(max(M, 8), 8)

    # concat + bf16 cast + zero-pad fused into one pass by XLA under this jit.
    x = jnp.concatenate([feat_a, feat_b], axis=0).astype(jnp.bfloat16)
    xp = jnp.zeros((Mp, Kp), jnp.bfloat16).at[:M, :Din].set(x)

    emb = encode_normalize(xp, wp, bp)               # (Mp, Dp) f32, row-normalized

    # Dense row gathers (one XLA gather each) -> batched loss-kernel inputs.
    anchors = jnp.take(emb, a_idx, axis=0)
    positives = jnp.take(emb, p_idx, axis=0)
    negatives = jnp.take(emb, n_idx, axis=0)

    Tp = a_idx.shape[0]
    valid_mask = (jnp.arange(Tp, dtype=jnp.int32) < n_valid
                  ).astype(jnp.float32)[:, None]                       # (Tp, 1)
    # torch.pairwise_distance's +eps restricted to the real Dout columns so the
    # zero-padded lanes contribute nothing; built once, loaded once in-kernel.
    eps_row = jnp.where(jnp.arange(Dp, dtype=jnp.int32) < dout,
                        jnp.float32(eps), jnp.float32(0.0))[None, :]    # (1, Dp)

    return triplet_margin_loss_batched(anchors, positives, negatives,
                                       valid_mask, eps_row, n_valid, margin)


# --------------------------------------------------------------------------
# Parameter prep (once per parameter set, NOT per loss call) and wrapper
# reproducing BinaryLabelTripletMarginLoss.forward.
# --------------------------------------------------------------------------
def prepare_encoder_params(w, b):
    """Pad + cast the static encoder parameters once, outside the call path."""
    Din, Dout = w.shape
    Kp = _round_up(max(Din, 128), 128)
    Dp = _round_up(max(Dout, 128), 128)
    wp = jnp.zeros((Kp, Dp), jnp.bfloat16).at[:Din, :Dout].set(w.astype(jnp.bfloat16))
    bp = jnp.zeros((1, Dp), jnp.float32).at[0, :Dout].set(b.astype(jnp.float32))
    return wp, bp, Dout


def binary_label_triplet_margin_loss(feat_a, feat_b, labels_np, wp, bp, dout,
                                     margin=1.0, eps=1e-6):
    # Triplet index construction on the host: labels are static host data and
    # the boolean-mask selection has data-dependent output shapes, which
    # cannot be expressed in JAX/Pallas.
    labels_np = np.asarray(labels_np)
    pos_idx = np.nonzero(labels_np == 1)[0]
    neg_idx = np.nonzero(labels_np != 1)[0]
    if pos_idx.size == 0 or neg_idx.size == 0:
        return jnp.float32(0.0)

    B = feat_a.shape[0]
    n_trip = int(pos_idx.size)

    if neg_idx.size < n_trip:
        neg_idx = np.tile(neg_idx, n_trip // neg_idx.size + 1)
    neg_idx = neg_idx[:n_trip]

    # Pad the triplet axis to a multiple of the loss-kernel tile T (<= 256);
    # padded slots point at row 0 and are zeroed by the validity mask.
    n8 = _round_up(max(n_trip, 8), 8)
    T = 256 if n8 >= 256 else n8
    Tp = _round_up(n8, T)

    a_idx = np.zeros(Tp, np.int32); a_idx[:n_trip] = pos_idx           # view a
    p_idx = np.zeros(Tp, np.int32); p_idx[:n_trip] = B + pos_idx       # view b
    n_idx = np.zeros(Tp, np.int32); n_idx[:n_trip] = B + neg_idx       # view b

    return _loss_impl(feat_a, feat_b, wp, bp,
                      jnp.asarray(a_idx), jnp.asarray(p_idx), jnp.asarray(n_idx),
                      dout=int(dout), n_valid=n_trip,
                      margin=float(margin), eps=float(eps))


# --------------------------------------------------------------------------
# Pure-JAX reference (same math incl. bf16 MXU operands) for a sanity check
# --------------------------------------------------------------------------
def _reference(feat_a, feat_b, labels_np, w, b, margin=1.0, eps=1e-6):
    def enc(x):
        e = jnp.dot(x.astype(jnp.bfloat16), w.astype(jnp.bfloat16),
                    preferred_element_type=jnp.float32) + b
        ss = jnp.sum(e * e, axis=1, keepdims=True)
        return e * lax.rsqrt(jnp.maximum(ss, 1e-24))

    ea, eb = enc(feat_a), enc(feat_b)
    labels_np = np.asarray(labels_np)
    pos_idx = np.nonzero(labels_np == 1)[0]
    neg_idx = np.nonzero(labels_np != 1)[0]
    if pos_idx.size == 0 or neg_idx.size == 0:
        return jnp.float32(0.0)
    a, p = ea[pos_idx], eb[pos_idx]
    if neg_idx.size < pos_idx.size:
        neg_idx = np.tile(neg_idx, pos_idx.size // neg_idx.size + 1)
    n = eb[neg_idx[: pos_idx.size]]
    d_pos = jnp.sqrt(jnp.sum((a - p + eps) ** 2, axis=1))
    d_neg = jnp.sqrt(jnp.sum((a - n + eps) ** 2, axis=1))
    return jnp.mean(jnp.maximum(d_pos - d_neg + margin, 0.0))


if __name__ == "__main__":
    B, D_IN, D_OUT = 8, 32, 32
    MARGIN = 1.0

    key = jax.random.PRNGKey(0)
    k_a, k_b, k_w, k_bias = jax.random.split(key, 4)

    # "sentence_features": two views, pre-pooled token features (B, D_in)
    feat_a = jax.random.normal(k_a, (B, D_IN), dtype=jnp.float32)
    feat_b = jax.random.normal(k_b, (B, D_IN), dtype=jnp.float32)

    # Deterministic synthetic SentenceTransformer encoder parameters
    w = jax.random.normal(k_w, (D_IN, D_OUT), dtype=jnp.float32) * (1.0 / np.sqrt(D_IN))
    bias = jax.random.normal(k_bias, (D_OUT,), dtype=jnp.float32) * 0.01

    # Static binary labels (5 positives, 3 negatives -> exercises repeat path)
    labels = np.array([1, 0, 1, 1, 0, 1, 0, 1], dtype=np.int32)

    # Parameter pad/cast hoisted out of the per-call path.
    wp, bp, dout = prepare_encoder_params(w, bias)

    loss = jax.block_until_ready(
        binary_label_triplet_margin_loss(feat_a, feat_b, labels, wp, bp, dout,
                                         margin=MARGIN))
    ref = jax.block_until_ready(
        _reference(feat_a, feat_b, labels, w, bias, margin=MARGIN))

    assert np.allclose(np.asarray(loss), np.asarray(ref), rtol=1e-4, atol=1e-4), (loss, ref)

    print("KERNEL_OK")
</pallas_src>

<mosaic_0001>
module attributes {stable_mosaic.version = 11 : i64} {
  func.func @_encode_normalize_kernel(%arg0: i32, %arg1: i32, %arg2: memref<16x128xbf16, #tpu.memory_space<vmem>>, %arg3: memref<128x128xbf16, #tpu.memory_space<vmem>>, %arg4: memref<1x128xf32, #tpu.memory_space<vmem>>, %arg5: memref<16x128xf32, #tpu.memory_space<vmem>>) attributes {dimension_semantics = [#tpu.dimension_semantics<parallel>, #tpu.dimension_semantics<arbitrary>], iteration_bounds = array<i64: 1, 1>, scalar_prefetch = 0 : i64, scratch_operands = 0 : i64, tpu.core_type = #tpu.core_type<tc>, window_params = [{transform_indices = @transform_0, window_bounds = array<i64: 16, 128>}, {pipeline_mode = #tpu.pipeline_mode<synchronous>, transform_indices = @transform_1, window_bounds = array<i64: 128, 128>}, {pipeline_mode = #tpu.pipeline_mode<synchronous>, transform_indices = @transform_2, window_bounds = array<i64: 1, 128>}, {transform_indices = @transform_3, window_bounds = array<i64: 16, 128>}]} {
    %c0_i32 = arith.constant 0 : i32
    %0 = arith.cmpi eq, %arg1, %c0_i32 : i32
    %1 = arith.extui %0 : i1 to i32
    %c0_i32_0 = arith.constant 0 : i32
    %2 = arith.cmpi ne, %1, %c0_i32_0 : i32
    scf.if %2 {
      %cst_9 = arith.constant 0.000000e+00 : f32
      %15 = vector.broadcast %cst_9 : f32 to vector<16x128xf32>
      %c0_10 = arith.constant 0 : index
      %c0_11 = arith.constant 0 : index
      %16 = vector.load %arg5[%c0_10, %c0_11] : memref<16x128xf32, #tpu.memory_space<vmem>>, vector<16x128xf32>
      tpu.vector_store %arg5[%c0_10, %c0_11], %15 {strides = array<i32>} : memref<16x128xf32, #tpu.memory_space<vmem>>, vector<16x128xf32>,
    } else {
    }
    %c128_i32 = arith.constant 128 : i32
    %3 = arith.muli %arg1, %c128_i32 : i32
    %4 = tpu.assume_multiple %3, 128 : i32
    %5 = arith.index_cast %4 : i32 to index
    %c0 = arith.constant 0 : index
    %6 = vector.load %arg3[%5, %c0] : memref<128x128xbf16, #tpu.memory_space<vmem>>, vector<128x128xbf16>
    %c0_1 = arith.constant 0 : index
    %c0_2 = arith.constant 0 : index
    %7 = vector.load %arg5[%c0_1, %c0_2] : memref<16x128xf32, #tpu.memory_space<vmem>>, vector<16x128xf32>
    %c0_3 = arith.constant 0 : index
    %c0_4 = arith.constant 0 : index
    %8 = vector.load %arg2[%c0_3, %c0_4] : memref<16x128xbf16, #tpu.memory_space<vmem>>, vector<16x128xbf16>
    %cst = arith.constant dense<0.000000e+00> : vector<16x128xf32>
    %9 = tpu.matmul %8, %6, %cst {dimension_numbers = #tpu.dot_dimension_numbers<[1], [0], [0], [1], [0, 0, 1, 1], [], []>} : vector<16x128xbf16>, vector<128x128xbf16>, vector<16x128xf32> -> vector<16x128xf32>
    %10 = arith.addf %7, %9 : vector<16x128xf32>
    %c0_5 = arith.constant 0 : index
    %c0_6 = arith.constant 0 : index
    %11 = vector.load %arg5[%c0_5, %c0_6] : memref<16x128xf32, #tpu.memory_space<vmem>>, vector<16x128xf32>
    tpu.vector_store %arg5[%c0_5, %c0_6], %10 {strides = array<i32>} : memref<16x128xf32, #tpu.memory_space<vmem>>, vector<16x128xf32>,
    %c0_i32_7 = arith.constant 0 : i32
    %12 = arith.cmpi eq, %arg1, %c0_i32_7 : i32
    %13 = arith.extui %12 : i1 to i32
    %c0_i32_8 = arith.constant 0 : i32
    %14 = arith.cmpi ne, %13, %c0_i32_8 : i32
    scf.if %14 {
      %c0_9 = arith.constant 0 : index
      %c0_10 = arith.constant 0 : index
      %15 = vector.load %arg5[%c0_9, %c0_10] : memref<16x128xf32, #tpu.memory_space<vmem>>, vector<16x128xf32>
      %c0_11 = arith.constant 0 : index
      %c0_12 = arith.constant 0 : index
      %16 = vector.load %arg4[%c0_11, %c0_12] : memref<1x128xf32, #tpu.memory_space<vmem>>, vector<1x128xf32>
      %17 = vector.broadcast %16 : vector<1x128xf32> to vector<16x128xf32>
      %18 = arith.addf %15, %17 : vector<16x128xf32>
      %19 = arith.mulf %18, %18 : vector<16x128xf32>
      %cst_13 = arith.constant dense<0.000000e+00> : vector<16xf32>
      %20 = vector.multi_reduction <add>, %19, %cst_13 [1] : vector<16x128xf32> to vector<16xf32>
      %21 = vector.shape_cast %20 : vector<16xf32> to vector<16x1xf32>
      %cst_14 = arith.constant 1.000000e-24 : f32
      %22 = vector.broadcast %cst_14 : f32 to vector<16x1xf32>
      %23 = arith.maximumf %21, %22 : vector<16x1xf32>
      %24 = math.rsqrt %23 : vector<16x1xf32>
      %25 = vector.broadcast %24 : vector<16x1xf32> to vector<16x128xf32>
      %26 = arith.mulf %18, %25 : vector<16x128xf32>
      %c0_15 = arith.constant 0 : index
      %c0_16 = arith.constant 0 : index
      %27 = vector.load %arg5[%c0_15, %c0_16] : memref<16x128xf32, #tpu.memory_space<vmem>>, vector<16x128xf32>
      tpu.vector_store %arg5[%c0_15, %c0_16], %26 {strides = array<i32>} : memref<16x128xf32, #tpu.memory_space<vmem>>, vector<16x128xf32>,
    } else {
    }
    return
  }
  func.func @transform_0(%arg0: i32, %arg1: i32) -> (i32, i32) {
    %c0_i32 = arith.constant 0 : i32
    return %arg0, %arg1 : i32, i32
  }
  func.func @transform_1(%arg0: i32, %arg1: i32) -> (i32, i32) {
    %c0_i32 = arith.constant 0 : i32
    %c0_i32_0 = arith.constant 0 : i32
    %c0_i32_1 = arith.constant 0 : i32
    return %c0_i32, %c0_i32_0 : i32, i32
  }
  func.func @transform_2(%arg0: i32, %arg1: i32) -> (i32, i32) {
    %c0_i32 = arith.constant 0 : i32
    %c0_i32_0 = arith.constant 0 : i32
    %c0_i32_1 = arith.constant 0 : i32
    return %c0_i32, %c0_i32_0 : i32, i32
  }
  func.func @transform_3(%arg0: i32, %arg1: i32) -> (i32, i32) {
    %c0_i32 = arith.constant 0 : i32
    %c0_i32_0 = arith.constant 0 : i32
    return %arg0, %c0_i32 : i32, i32
  }
}

module attributes {stable_mosaic.version = 11 : i64} {
  func.func @_triplet_loss_kernel(%arg0: i32, %arg1: memref<8x128xf32, #tpu.memory_space<vmem>>, %arg2: memref<8x128xf32, #tpu.memory_space<vmem>>, %arg3: memref<8x128xf32, #tpu.memory_space<vmem>>, %arg4: memref<1x128xf32, #tpu.memory_space<vmem>>, %arg5: memref<8x1xf32, #tpu.memory_space<vmem>>, %arg6: memref<1x1xf32, #tpu.memory_space<smem>>, %arg7: memref<1x1xf32, #tpu.memory_space<vmem>>) attributes {dimension_semantics = [#tpu.dimension_semantics<arbitrary>], iteration_bounds = array<i64: 1>, scalar_prefetch = 0 : i64, scratch_operands = 1 : i64, tpu.core_type = #tpu.core_type<tc>, window_params = [{transform_indices = @transform_0, window_bounds = array<i64: 8, 128>}, {transform_indices = @transform_1, window_bounds = array<i64: 8, 128>}, {transform_indices = @transform_2, window_bounds = array<i64: 8, 128>}, {pipeline_mode = #tpu.pipeline_mode<synchronous>, transform_indices = @transform_3, window_bounds = array<i64: 1, 128>}, {transform_indices = @transform_4, window_bounds = array<i64: 8, 1>}, {transform_indices = @transform_5, window_bounds = array<i64: 1, 1>}]} {
    %c0_i32 = arith.constant 0 : i32
    %0 = arith.cmpi eq, %arg0, %c0_i32 : i32
    %1 = arith.extui %0 : i1 to i32
    %c0_i32_0 = arith.constant 0 : i32
    %2 = arith.cmpi ne, %1, %c0_i32_0 : i32
    scf.if %2 {
      %cst_20 = arith.constant 0.000000e+00 : f32
      %36 = vector.broadcast %cst_20 : f32 to vector<1x1xf32>
      %c0_21 = arith.constant 0 : index
      %c0_22 = arith.constant 0 : index
      %37 = vector.load %arg7[%c0_21, %c0_22] : memref<1x1xf32, #tpu.memory_space<vmem>>, vector<1x1xf32>
      tpu.vector_store %arg7[%c0_21, %c0_22], %36 {strides = array<i32>} : memref<1x1xf32, #tpu.memory_space<vmem>>, vector<1x1xf32>,
    } else {
    }
    %c0 = arith.constant 0 : index
    %c0_1 = arith.constant 0 : index
    %3 = vector.load %arg4[%c0, %c0_1] : memref<1x128xf32, #tpu.memory_space<vmem>>, vector<1x128xf32>
    %c0_2 = arith.constant 0 : index
    %c0_3 = arith.constant 0 : index
    %4 = vector.load %arg1[%c0_2, %c0_3] : memref<8x128xf32, #tpu.memory_space<vmem>>, vector<8x128xf32>
    %c0_4 = arith.constant 0 : index
    %c0_5 = arith.constant 0 : index
    %5 = vector.load %arg2[%c0_4, %c0_5] : memref<8x128xf32, #tpu.memory_space<vmem>>, vector<8x128xf32>
    %6 = arith.subf %4, %5 : vector<8x128xf32>
    %7 = vector.broadcast %3 : vector<1x128xf32> to vector<8x128xf32>
    %8 = arith.addf %6, %7 : vector<8x128xf32>
    %c0_6 = arith.constant 0 : index
    %c0_7 = arith.constant 0 : index
    %9 = vector.load %arg3[%c0_6, %c0_7] : memref<8x128xf32, #tpu.memory_space<vmem>>, vector<8x128xf32>
    %10 = arith.subf %4, %9 : vector<8x128xf32>
    %11 = vector.broadcast %3 : vector<1x128xf32> to vector<8x128xf32>
    %12 = arith.addf %10, %11 : vector<8x128xf32>
    %13 = arith.mulf %8, %8 : vector<8x128xf32>
    %cst = arith.constant dense<0.000000e+00> : vector<8xf32>
    %14 = vector.multi_reduction <add>, %13, %cst [1] : vector<8x128xf32> to vector<8xf32>
    %15 = vector.shape_cast %14 : vector<8xf32> to vector<8x1xf32>
    %16 = math.sqrt %15 : vector<8x1xf32>
    %17 = arith.mulf %12, %12 : vector<8x128xf32>
    %cst_8 = arith.constant dense<0.000000e+00> : vector<8xf32>
    %18 = vector.multi_reduction <add>, %17, %cst_8 [1] : vector<8x128xf32> to vector<8xf32>
    %19 = vector.shape_cast %18 : vector<8xf32> to vector<8x1xf32>
    %20 = math.sqrt %19 : vector<8x1xf32>
    %21 = arith.subf %16, %20 : vector<8x1xf32>
    %cst_9 = arith.constant 1.000000e+00 : f32
    %22 = vector.broadcast %cst_9 : f32 to vector<8x1xf32>
    %23 = arith.addf %21, %22 : vector<8x1xf32>
    %cst_10 = arith.constant 0.000000e+00 : f32
    %24 = vector.broadcast %cst_10 : f32 to vector<8x1xf32>
    %25 = arith.maximumf %23, %24 : vector<8x1xf32>
    %c0_11 = arith.constant 0 : index
    %c0_12 = arith.constant 0 : index
    %26 = vector.load %arg5[%c0_11, %c0_12] : memref<8x1xf32, #tpu.memory_space<vmem>>, vector<8x1xf32>
    %27 = arith.mulf %25, %26 : vector<8x1xf32>
    %c0_13 = arith.constant 0 : index
    %c0_14 = arith.constant 0 : index
    %28 = vector.load %arg7[%c0_13, %c0_14] : memref<1x1xf32, #tpu.memory_space<vmem>>, vector<1x1xf32>
    %cst_15 = arith.constant dense<0.000000e+00> : vector<1xf32>
    %29 = vector.multi_reduction <add>, %27, %cst_15 [0] : vector<8x1xf32> to vector<1xf32>
    %30 = vector.shape_cast %29 : vector<1xf32> to vector<1x1xf32>
    %31 = arith.addf %28, %30 : vector<1x1xf32>
    %c0_16 = arith.constant 0 : index
    %c0_17 = arith.constant 0 : index
    %32 = vector.load %arg7[%c0_16, %c0_17] : memref<1x1xf32, #tpu.memory_space<vmem>>, vector<1x1xf32>
    tpu.vector_store %arg7[%c0_16, %c0_17], %31 {strides = array<i32>} : memref<1x1xf32, #tpu.memory_space<vmem>>, vector<1x1xf32>,
    %c0_i32_18 = arith.constant 0 : i32
    %33 = arith.cmpi eq, %arg0, %c0_i32_18 : i32
    %34 = arith.extui %33 : i1 to i32
    %c0_i32_19 = arith.constant 0 : i32
    %35 = arith.cmpi ne, %34, %c0_i32_19 : i32
    scf.if %35 {
      %c0_20 = arith.constant 0 : index
      %c0_21 = arith.constant 0 : index
      %36 = vector.load %arg7[%c0_20, %c0_21] : memref<1x1xf32, #tpu.memory_space<vmem>>, vector<1x1xf32>
      %37 = vector.shape_cast %36 : vector<1x1xf32> to vector<1x1x1xf32>
      %cst_22 = arith.constant dense<0.000000e+00> : vector<1xf32>
      %38 = vector.multi_reduction <add>, %37, %cst_22 [1, 2] : vector<1x1x1xf32> to vector<1xf32>
      %39 = vector.shape_cast %38 : vector<1xf32> to vector<1x1x1xf32>
      %40 = vector.extract %39[0, 0, 0] : f32 from vector<1x1x1xf32>
      %cst_23 = arith.constant 2.000000e-01 : f32
      %41 = arith.mulf %40, %cst_23 : f32
      %c0_24 = arith.constant 0 : index
      %c0_25 = arith.constant 0 : index
      %42 = memref.load %arg6[%c0_24, %c0_25] : memref<1x1xf32, #tpu.memory_space<smem>>
      memref.store %41, %arg6[%c0_24, %c0_25] : memref<1x1xf32, #tpu.memory_space<smem>>
    } else {
    }
    return
  }
  func.func @transform_0(%arg0: i32) -> (i32, i32) {
    %c0_i32 = arith.constant 0 : i32
    %c0_i32_0 = arith.constant 0 : i32
    return %arg0, %c0_i32 : i32, i32
  }
  func.func @transform_1(%arg0: i32) -> (i32, i32) {
    %c0_i32 = arith.constant 0 : i32
    %c0_i32_0 = arith.constant 0 : i32
    return %arg0, %c0_i32 : i32, i32
  }
  func.func @transform_2(%arg0: i32) -> (i32, i32) {
    %c0_i32 = arith.constant 0 : i32
    %c0_i32_0 = arith.constant 0 : i32
    return %arg0, %c0_i32 : i32, i32
  }
  func.func @transform_3(%arg0: i32) -> (i32, i32) {
    %c0_i32 = arith.constant 0 : i32
    %c0_i32_0 = arith.constant 0 : i32
    %c0_i32_1 = arith.constant 0 : i32
    return %c0_i32, %c0_i32_0 : i32, i32
  }
  func.func @transform_4(%arg0: i32) -> (i32, i32) {
    %c0_i32 = arith.constant 0 : i32
    %c0_i32_0 = arith.constant 0 : i32
    return %arg0, %c0_i32 : i32, i32
  }
  func.func @transform_5(%arg0: i32) -> (i32, i32) {
    %c0_i32 = arith.constant 0 : i32
    %c0_i32_0 = arith.constant 0 : i32
    %c0_i32_1 = arith.constant 0 : i32
    return %c0_i32, %c0_i32_0 : i32, i32
  }
}

</mosaic_0001>

<llo_original>
// kernel: _loss_impl.2
$region0: #{_loss_impl.2}
  #allocation0 [shape = 'u32[]', space=smem, size = 0x4, offset = 0x4, fixed_abs, tag = 'smem constant byte address 0x4 - core index']
  #allocation1 [shape = 'u32[144,128]{1,0:T(1,128)}', space=vmem, size = 0x12000, scoped, tag = 'internal scratch']
  %s0 = inlined_call_operand.vmem [shape: bf16[16,128], index: 0, kind: input, shape index: {}]
  %s1 = inlined_call_operand.vmem [shape: bf16[128,128], index: 1, kind: input, shape index: {}]
  %s2 = inlined_call_operand.hbm [shape: f32[1,128], index: 2, kind: input, shape index: {}]
  %s3 = inlined_call_operand.vmem [shape: f32[16,128], index: 3, kind: output, shape index: {}]
  %s4 = sld [smem:[#allocation0]]
  $region34: #{_loss_impl.2} parent=0
    _
  %s6 = ssub.s32 1, %s4
  %s7 = scalar_select 0, %s6, %s4
  $region1: #{_loss_impl.2} parent=0
    #allocation2 [shape = 'u8[512]{0}', space=vmem, size = 0x400, scoped, tag = 'input window, operand 2, single buffered']
    #allocation3 [shape = 's32[1]{0}', space=sflag, size = 0x4, scoped, tag = 'scoped memory for _loss_impl.2']
    %8 = vsyncpa [#allocation3], 0
    // Predicated region
    $region2: #{_loss_impl.2} parent=1 // pred_check
      _
    $region3: #{_loss_impl.2} parent=1 // pred_check_branch
      %10 = sbr.rel (0) target = $region5
    $region4: #{_loss_impl.2} parent=1 // pred_region
      _
    $region5: #{_loss_impl.2} parent=1 // pred_fallthru
      _
    // Predicated region
    $region6: #{_loss_impl.2} parent=1 // pred_check
      _
    $region7: #{_loss_impl.2} parent=1 // pred_check_branch
      %12 = sbr.rel (0) target = $region9
    $region8: #{_loss_impl.2} parent=1 // pred_region
      _
    $region9: #{_loss_impl.2} parent=1 // pred_fallthru
      _
    // Predicated region
    $region10: #{_loss_impl.2} parent=1 // pred_check
      _
    $region11: #{_loss_impl.2} parent=1 // pred_check_branch
      %14 = sbr.rel (0) target = $region13
    $region12: #{_loss_impl.2} parent=1 // pred_region
      %s16 = ssub.s32 16, 16
      %17 = vsyncadd [#allocation3], %s16
      %s19 = sshll.u32 [#allocation2], 4
      %s20 = int_to_ptr.vmem [resolvable:$true] %s19
      %22 = dma.hbm_to_vmem [thread:$0]  %s2, 16, %s20, [#allocation3]
    $region13: #{_loss_impl.2} parent=1 // pred_fallthru
      _
    // Predicated region
    $region14: #{_loss_impl.2} parent=1 // pred_check
      _
    $region15: #{_loss_impl.2} parent=1 // pred_check_branch
      %24 = sbr.rel (0) target = $region17
    $region16: #{_loss_impl.2} parent=1 // pred_region
      %25 = dma.done [#allocation3], 16
    $region17: #{_loss_impl.2} parent=1 // pred_fallthru
      _
    %p27 = scmp.eq.s32.totalorder 0, 0
    // Predicated region
    $region18: #{_loss_impl.2} parent=1 // pred_check
      %p28 = pneg %p27
    $region19: #{_loss_impl.2} parent=1 // pred_check_branch
      %30 = sbr.rel (%p28) target = $region21
    $region20: #{_loss_impl.2} parent=1 // pred_region
      %31 = vst [vmem:[%s3] sm:$0xff] 0.0
      %32 = vst [vmem:[%s3 + $0x8] sm:$0xff] 0.0
    $region21: #{_loss_impl.2} parent=1 // pred_fallthru
      _
    %s33 = smul.u32 0, 128
    %s34 = sshra.s32 %s33, 3
    %s35 = sand.u32 %s33, 7
    %s36 = smul.addr %s34, 4
    %s37 = scalar_lea.vmem %s1, %s36
    %v38 = vld [vmem:[%s37] sm:$0xf]
    %v39 = vld [vmem:[%s37 + $0x4] sm:$0xf]
    %v40 = vld [vmem:[%s37 + $0x8] sm:$0xf]
    %v41 = vld [vmem:[%s37 + $0xc] sm:$0xf]
    %v42 = vld [vmem:[%s37 + $0x10] sm:$0xf]
    %v43 = vld [vmem:[%s37 + $0x14] sm:$0xf]
    %v44 = vld [vmem:[%s37 + $0x18] sm:$0xf]
    %v45 = vld [vmem:[%s37 + $0x1c] sm:$0xf]
    %v46 = vld [vmem:[%s37 + $0x20] sm:$0xf]
    %v47 = vld [vmem:[%s37 + $0x24] sm:$0xf]
    %v48 = vld [vmem:[%s37 + $0x28] sm:$0xf]
    %v49 = vld [vmem:[%s37 + $0x2c] sm:$0xf]
    %v50 = vld [vmem:[%s37 + $0x30] sm:$0xf]
    %v51 = vld [vmem:[%s37 + $0x34] sm:$0xf]
    %v52 = vld [vmem:[%s37 + $0x38] sm:$0xf]
    %v53 = vld [vmem:[%s37 + $0x3c] sm:$0xf]
    %v54 = vld [vmem:[%s3] sm:$0xff]
    %v55 = vld [vmem:[%s3 + $0x8] sm:$0xff]
    %v56 = vld [vmem:[%s0] sm:$0xf]
    %v57 = vld [vmem:[%s0 + $0x4] sm:$0xf]
    %v60 = vunpack.c.l.b16 %v56
    %v61 = vunpack.c.l.b16 %v57
    %v62 = vpack.c.b16 %v61, %v60
    %v80 = vunpack.c.l.b16 %v38
    %v81 = vunpack.c.l.b16 %v39
    %v82 = vunpack.c.l.b16 %v40
    %v83 = vunpack.c.l.b16 %v41
    %v84 = vunpack.c.l.b16 %v42
    %v85 = vunpack.c.l.b16 %v43
    %v86 = vunpack.c.l.b16 %v44
    %v87 = vunpack.c.l.b16 %v45
    %v88 = vunpack.c.l.b16 %v46
    %v89 = vunpack.c.l.b16 %v47
    %v90 = vunpack.c.l.b16 %v48
    %v91 = vunpack.c.l.b16 %v49
    %v92 = vunpack.c.l.b16 %v50
    %v93 = vunpack.c.l.b16 %v51
    %v94 = vunpack.c.l.b16 %v52
    %v95 = vunpack.c.l.b16 %v53
    %v96 = vpack.c.b16 %v81, %v80
    %v97 = vpack.c.b16 %v83, %v82
    %v98 = vpack.c.b16 %v85, %v84
    %v99 = vpack.c.b16 %v87, %v86
    %v100 = vpack.c.b16 %v89, %v88
    %v101 = vpack.c.b16 %v91, %v90
    %v102 = vpack.c.b16 %v93, %v92
    %v103 = vpack.c.b16 %v95, %v94
    %112 = vmatprep.subr.bf16.mxu0 0
    %113 = vmatpush1.bf16.msra.mxu0 %v96
    %114 = vmatprep.subr.bf16.mxu0 0
    %115 = vmatpush1.bf16.msra.mxu0 %v97
    %116 = vmatprep.subr.bf16.mxu0 0
    %117 = vmatpush1.bf16.msra.mxu0 %v98
    %118 = vmatprep.subr.bf16.mxu0 0
    %119 = vmatpush1.bf16.msra.mxu0 %v99
    %120 = vmatprep.subr.bf16.mxu0 0
    %121 = vmatpush1.bf16.msra.mxu0 %v100
    %122 = vmatprep.subr.bf16.mxu0 0
    %123 = vmatpush1.bf16.msra.mxu0 %v101
    %124 = vmatprep.subr.bf16.mxu0 0
    %125 = vmatpush1.bf16.msra.mxu0 %v102
    %126 = vmatprep.subr.bf16.mxu0 0
    %127 = vmatpush1.bf16.msra.mxu0 %v103
    %128 = vmatprep.subr.bf16.mxu0 0
    %129 = vmatpush1.bf16.msra.mxu0 0
    %130 = vmatprep.subr.bf16.mxu0 0
    %131 = vmatpush1.bf16.msra.mxu0 0
    %132 = vmatprep.subr.bf16.mxu0 0
    %133 = vmatpush1.bf16.msra.mxu0 0
    %134 = vmatprep.subr.bf16.mxu0 0
    %135 = vmatpush1.bf16.msra.mxu0 0
    %136 = vmatprep.subr.bf16.mxu0 0
    %137 = vmatpush1.bf16.msra.mxu0 0
    %138 = vmatprep.subr.bf16.mxu0 0
    %139 = vmatpush1.bf16.msra.mxu0 0
    %140 = vmatprep.subr.bf16.mxu0 0
    %141 = vmatpush1.bf16.msra.mxu0 0
    %142 = vmatprep.subr.bf16.mxu0 0
    %143 = vmatpush1.bf16.msra.mxu0 0
    %144 = vmatprep.mubr.bf16.mxu0 0
    %145 = vmatmul.mubr.bf16.gmra.mrb[0].mxu0 %v62
    %v146 = vpop.f32.mrb[0].mxu0
    %v147 = vadd.f32 0.0, %v146
    %v148 = vpop.f32.mrb[0].mxu0
    %v149 = vpop.f32.mrb[0].mxu0
    %v150 = vadd.f32 0.0, %v149
    %v151 = vpop.f32.mrb[0].mxu0
    %152 = vdwg.mxu0
    %v153 = vadd.f32 %v54, %v147
    %v154 = vadd.f32 %v55, %v150
    %155 = vst [vmem:[%s3] sm:$0xff] %v153
    %156 = vst [vmem:[%s3 + $0x8] sm:$0xff] %v154
    // Predicated region
    $region22: #{_loss_impl.2} parent=1 // pred_check
      %p157 = pneg %p27
    $region23: #{_loss_impl.2} parent=1 // pred_check_branch
      %159 = sbr.rel (%p157) target = $region25
    $region24: #{_loss_impl.2} parent=1 // pred_region
      %v160 = vld [vmem:[%s3] sm:$0xff]
      %v161 = vld [vmem:[%s3 + $0x8] sm:$0xff]
      %v162 = vld [vmem:[#allocation2] sm:$0x1]
      %v164 = vlaneseq
      %v165 = vshrl.u32 %v164, 7
      %v166 = vsub.s32 0, %v165
      %v167 = vrot.slane %v162, %v166
      %v169 = vadd.f32 %v160, %v167
      %v170 = vadd.f32 %v161, %v167
      %v171 = vmul.f32 %v169, %v169
      %v172 = vmul.f32 %v170, %v170
      %173 = vadd.xlane.f32.xlu0 %v171
      %v174 = vpop.xlane.xlu0 %173
      %175 = vadd.xlane.f32.xlu0 %v172
      %v176 = vpop.xlane.xlu0 %175
      %v177 = vmax.f32 %v174, 1e-24
      %v178 = vmax.f32 %v176, 1e-24
      %v179 = vrsqrt.pop %v177
      %v180 = vrsqrt.pop %v178
      %v181 = vmul.f32 %v169, %v179
      %v182 = vmul.f32 %v170, %v180
      %183 = vst [vmem:[%s3] sm:$0xff] %v181
      %184 = vst [vmem:[%s3 + $0x8] sm:$0xff] %v182
    $region25: #{_loss_impl.2} parent=1 // pred_fallthru
      _
    // Predicated region
    $region26: #{_loss_impl.2} parent=1 // pred_check
      _
    $region27: #{_loss_impl.2} parent=1 // pred_check_branch
      %186 = sbr.rel (0) target = $region29
    $region28: #{_loss_impl.2} parent=1 // pred_region
      _
    $region29: #{_loss_impl.2} parent=1 // pred_fallthru
      _
    // Predicated region
    $region30: #{_loss_impl.2} parent=1 // pred_check
      _
    $region31: #{_loss_impl.2} parent=1 // pred_check_branch
      %188 = sbr.rel (0) target = $region33
    $region32: #{_loss_impl.2} parent=1 // pred_region
      _
    $region33: #{_loss_impl.2} parent=1 // pred_fallthru
      _
    %189 = vsyncpa [#allocation3], 1

// kernel: _loss_impl.3
$region0: #{_loss_impl.3}
  #allocation0 [shape = 'u32[]', space=smem, size = 0x4, offset = 0x4, fixed_abs, tag = 'smem constant byte address 0x4 - core index']
  #allocation1 [shape = 'u32[144,128]{1,0:T(1,128)}', space=vmem, size = 0x12000, scoped, tag = 'internal scratch']
  #allocation2 [shape = 'f32[1,1]{1,0:T(1,128)}', space=vmem, size = 0x200, scoped, tag = 'scratch operand']
  %s0 = inlined_call_operand.vmem [shape: f32[8,128], index: 0, kind: input, shape index: {}]
  %s1 = inlined_call_operand.vmem [shape: f32[8,128], index: 1, kind: input, shape index: {}]
  %s2 = inlined_call_operand.vmem [shape: f32[8,128], index: 2, kind: input, shape index: {}]
  %s3 = inlined_call_operand.vmem [shape: f32[1,128], index: 3, kind: input, shape index: {}]
  %s4 = inlined_call_operand.vmem [shape: f32[8,1], index: 4, kind: input, shape index: {}]
  %s5 = inlined_call_operand.hbm [shape: f32[1,1], index: 5, kind: output, shape index: {}]
  %s6 = sld [smem:[#allocation0]]
  $region38: #{_loss_impl.3} parent=0
    _
  %s8 = ssub.s32 1, %s6
  %s9 = scalar_select 0, %s8, %s6
  $region1: #{_loss_impl.3} parent=0
    #allocation3 [shape = 'u8[512]{0}', space=smem, size = 0x200, scoped, tag = 'output window, operand 0, single buffered']
    #allocation4 [shape = 's32[1]{0}', space=sflag, size = 0x4, scoped, tag = 'scoped memory for _loss_impl.3']
    %10 = vsyncpa [#allocation4], 0
    // Predicated region
    $region2: #{_loss_impl.3} parent=1 // pred_check
      _
    $region3: #{_loss_impl.3} parent=1 // pred_check_branch
      %12 = sbr.rel (0) target = $region5
    $region4: #{_loss_impl.3} parent=1 // pred_region
      _
    $region5: #{_loss_impl.3} parent=1 // pred_fallthru
      _
    // Predicated region
    $region6: #{_loss_impl.3} parent=1 // pred_check
      _
    $region7: #{_loss_impl.3} parent=1 // pred_check_branch
      %14 = sbr.rel (0) target = $region9
    $region8: #{_loss_impl.3} parent=1 // pred_region
      _
    $region9: #{_loss_impl.3} parent=1 // pred_fallthru
      _
    // Predicated region
    $region10: #{_loss_impl.3} parent=1 // pred_check
      _
    $region11: #{_loss_impl.3} parent=1 // pred_check_branch
      %16 = sbr.rel (0) target = $region13
    $region12: #{_loss_impl.3} parent=1 // pred_region
      _
    $region13: #{_loss_impl.3} parent=1 // pred_fallthru
      _
    // Predicated region
    $region14: #{_loss_impl.3} parent=1 // pred_check
      _
    $region15: #{_loss_impl.3} parent=1 // pred_check_branch
      %18 = sbr.rel (0) target = $region17
    $region16: #{_loss_impl.3} parent=1 // pred_region
      _
    $region17: #{_loss_impl.3} parent=1 // pred_fallthru
      _
    // Predicated region
    $region18: #{_loss_impl.3} parent=1 // pred_check
      _
    $region19: #{_loss_impl.3} parent=1 // pred_check_branch
      %20 = sbr.rel (0) target = $region21
    $region20: #{_loss_impl.3} parent=1 // pred_region
      _
    $region21: #{_loss_impl.3} parent=1 // pred_fallthru
      _
    %p21 = scmp.eq.s32.totalorder 0, 0
    // Predicated region
    $region22: #{_loss_impl.3} parent=1 // pred_check
      %p22 = pneg %p21
    $region23: #{_loss_impl.3} parent=1 // pred_check_branch
      %24 = sbr.rel (%p22) target = $region25
    $region24: #{_loss_impl.3} parent=1 // pred_region
      %vm25 = vcmask 0
      %26 = vst.msk [vmem:[#allocation2] sm:$0x1] %vm25, 0.0
    $region25: #{_loss_impl.3} parent=1 // pred_fallthru
      _
    %v27 = vld [vmem:[%s3] sm:$0x1]
    %v28 = vld [vmem:[%s0] sm:$0xff]
    %v29 = vld [vmem:[%s1] sm:$0xff]
    %v30 = vsub.f32 %v28, %v29
    %v32 = vlaneseq
    %v33 = vshrl.u32 %v32, 7
    %v34 = vsub.s32 0, %v33
    %v35 = vrot.slane %v27, %v34
    %v37 = vadd.f32 %v30, %v35
    %v38 = vld [vmem:[%s2] sm:$0xff]
    %v39 = vsub.f32 %v28, %v38
    %v40 = vadd.f32 %v39, %v35
    %v41 = vmul.f32 %v37, %v37
    %42 = vadd.xlane.f32.xlu0 %v41
    %v43 = vpop.xlane.xlu0 %42
    %v44 = vrsqrt.pop %v43
    %v45 = vmul.f32 %v43, %v44
    %vm46 = vcmp.eq.f32.partialorder %v43, inf
    %v47 = vsel %vm46, %v43, %v45
    %vm48 = vcmp.eq.f32.partialorder %v43, 0.0
    %v49 = vand.u32 %v43, 2147483648
    %v50 = vsel %vm48, %v49, %v47
    %v51 = vmul.f32 %v40, %v40
    %52 = vadd.xlane.f32.xlu0 %v51
    %v53 = vpop.xlane.xlu0 %52
    %v54 = vrsqrt.pop %v53
    %v55 = vmul.f32 %v53, %v54
    %vm56 = vcmp.eq.f32.partialorder %v53, inf
    %v57 = vsel %vm56, %v53, %v55
    %vm58 = vcmp.eq.f32.partialorder %v53, 0.0
    %v59 = vand.u32 %v53, 2147483648
    %v60 = vsel %vm58, %v59, %v57
    %v61 = vsub.f32 %v50, %v60
    %v62 = vadd.f32 %v61, 1.0
    %v63 = vmax.f32 %v62, 0.0
    %v64 = vld [vmem:[%s4] sm:$0xff]
    %v65 = vmul.f32 %v63, %v64
    %v66 = vld [vmem:[#allocation2] sm:$0x1]
    %vm67 = vcmask 7168
    %v68 = vsel %vm67, %v65, 0.0
    %v69 = vrot.slane %v68, 4
    %v70 = vadd.f32 %v68, %v69
    %v71 = vrot.slane %v70, 2
    %v72 = vadd.f32 %v70, %v71
    %v73 = vrot.slane %v72, 1
    %v74 = vadd.f32 %v72, %v73
    %v75 = vadd.f32 %v66, %v74
    %vm76 = vcmask 0
    %77 = vst.msk [vmem:[#allocation2] sm:$0x1] %vm76, %v75
    // Predicated region
    $region26: #{_loss_impl.3} parent=1 // pred_check
      %p78 = pneg %p21
    $region27: #{_loss_impl.3} parent=1 // pred_check_branch
      %80 = sbr.rel (%p78) target = $region29
    $region28: #{_loss_impl.3} parent=1 // pred_region
      %v81 = vld [vmem:[#allocation2] sm:$0x1]
      %v82 = vadd.f32 %v81, 0.0
      %s83 = vtos %v82
      %s84 = smul.f32 %s83, 0.2
      %s85 = scalar_lea.smem [#allocation3], 0
      %86 = sst [smem:[%s85]] %s84
    $region29: #{_loss_impl.3} parent=1 // pred_fallthru
      _
    // Predicated region
    $region30: #{_loss_impl.3} parent=1 // pred_check
      _
    $region31: #{_loss_impl.3} parent=1 // pred_check_branch
      %88 = sbr.rel (0) target = $region33
    $region32: #{_loss_impl.3} parent=1 // pred_region
      %s90 = ssub.s32 16, 16
      %91 = vsyncadd [#allocation4], %s90
      %94 = dma.smem_to_hbm [#allocation3], 16, %s5, [#allocation4]
    $region33: #{_loss_impl.3} parent=1 // pred_fallthru
      _
    // Predicated region
    $region34: #{_loss_impl.3} parent=1 // pred_check
      _
    $region35: #{_loss_impl.3} parent=1 // pred_check_branch
      %96 = sbr.rel (0) target = $region37
    $region36: #{_loss_impl.3} parent=1 // pred_region
      %97 = dma.done [#allocation4], 16
    $region37: #{_loss_impl.3} parent=1 // pred_fallthru
      _
    %98 = sfence
    %99 = vsyncpa [#allocation4], 1

</llo_original>
